<compile_context>
chip_gen: v5e
topology: v5e:2x2
jax: 0.10.0
libtpu: 0.0.40
codegen_flags: <defaults>
</compile_context>

<pallas_src>
import math

import jax
import jax.numpy as jnp
from jax.experimental import pallas as pl
from jax.experimental.pallas import tpu as pltpu


def _patch_embed_matmul_kernel(p_ref, w_ref, b_ref, o_ref):
    """One (tm, tn) output tile: single MXU dot over the full K, f32 accumulate."""
    acc = jnp.dot(p_ref[...], w_ref[...], preferred_element_type=jnp.float32)
    o_ref[...] = (acc + b_ref[...].astype(jnp.float32)).astype(o_ref.dtype)


def _round_up(x, m):
    return ((x + m - 1) // m) * m


def _projection_matmul(patches, w2d, bias2d, out_dtype):
    """patches (M, K) @ w2d (K, E) + bias2d (1, E) -> (M, E) in out_dtype."""
    M, K = patches.shape
    Kw, E = w2d.shape
    assert K == Kw

    # Row tile: multiple of 16 (bf16 sublane packing), capped at 512 so the
    # double-buffered patches block stays ~1-2 MiB.
    tm = 512 if M >= 512 else _round_up(max(M, 1), 16)
    M_pad = _round_up(M, tm)

    # Lane dim: pad to a multiple of 128 (lane-dense stores).  Keep the whole embed
    # dim in one tile when it is small enough for the weight to sit resident in VMEM.
    N_pad = max(128, _round_up(E, 128))
    if N_pad <= 1024:
        tn = N_pad
    else:
        N_pad = _round_up(N_pad, 256)
        tn = 256

    if M_pad != M:
        patches = jnp.pad(patches, ((0, M_pad - M), (0, 0)))
    if N_pad != E:
        w2d = jnp.pad(w2d, ((0, 0), (0, N_pad - E)))
        bias2d = jnp.pad(bias2d, ((0, 0), (0, N_pad - E)))

    # Grid: N tiles outer, M tiles inner -> the weight/bias block index is constant
    # across the whole inner loop, so Pallas DMAs the weight once per N tile (once
    # total in the common case N_pad <= 1024).  Both axes are independent ->
    # "parallel" (shards across the 2 TensorCores on v7x when M//tm >= 2).
    grid = (N_pad // tn, M_pad // tm)

    out = pl.pallas_call(
        _patch_embed_matmul_kernel,
        out_shape=jax.ShapeDtypeStruct((M_pad, N_pad), out_dtype),
        grid_spec=pltpu.PrefetchScalarGridSpec(
            num_scalar_prefetch=0,
            grid=grid,
            in_specs=[
                pl.BlockSpec((tm, K), lambda j, i: (i, 0)),   # patches: streamed over M
                pl.BlockSpec((K, tn), lambda j, i: (0, j)),   # weight: resident per N tile
                pl.BlockSpec((1, tn), lambda j, i: (0, j)),   # bias:   resident per N tile
            ],
            out_specs=pl.BlockSpec((tm, tn), lambda j, i: (i, j)),
        ),
        compiler_params=pltpu.CompilerParams(
            dimension_semantics=("parallel", "parallel"),
            vmem_limit_bytes=32 * 1024 * 1024,
        ),
    )(patches, w2d, bias2d)

    return out[:M, :E]


def patch_embed(x, weight, bias, *, compute_dtype=jnp.bfloat16):
    """Forward pass of PatchEmbed: Conv2d(stride=patch) + flatten(2) + transpose(1,2).

    compute_dtype: dtype of the matmul operands (accumulation is always f32, output
    dtype is x.dtype).  bfloat16 is MXU-native and halves HBM traffic; pass
    jnp.float32 (or None) for exact f32 parity with the PyTorch reference.
    """
    B, C, H, W = x.shape
    E, Cw, Ph, Pw = weight.shape
    assert C == Cw, "channel mismatch between input and projection weight"
    Hp, Wp = H // Ph, W // Pw
    Np = Hp * Wp
    K = C * Ph * Pw

    # Patchify (layout plumbing, done once in the wrapper):
    # (B, C, Hp, Ph, Wp, Pw) -> (B, Hp, Wp, C, Ph, Pw) -> (B*Np, C*Ph*Pw)
    p = x.reshape(B, C, Hp, Ph, Wp, Pw).transpose(0, 2, 4, 1, 3, 5)
    patches = p.reshape(B * Np, K)

    w2d = weight.reshape(E, K).T            # (K, E): K on sublane, embed dim on lanes
    bias2d = bias.reshape(1, E).astype(jnp.float32)

    if compute_dtype is not None:
        patches = patches.astype(compute_dtype)
        w2d = w2d.astype(compute_dtype)

    out2d = _projection_matmul(patches, w2d, bias2d, x.dtype)
    return out2d.reshape(B, Np, E)


class PatchEmbed:
    """Mirror of the PyTorch module: Conv2d patch projection with bias."""

    def __init__(self, img_size=224, patch_size=16, in_chans=3, embed_dim=768,
                 *, key, dtype=jnp.float32, compute_dtype=jnp.bfloat16):
        img_size = (img_size, img_size) if isinstance(img_size, int) else tuple(img_size)
        patch_size = (patch_size, patch_size) if isinstance(patch_size, int) else tuple(patch_size)
        self.img_size = img_size
        self.patch_size = patch_size
        self.num_patches = (img_size[1] // patch_size[1]) * (img_size[0] // patch_size[0])
        self.compute_dtype = compute_dtype

        # nn.Conv2d default init: U(-1/sqrt(fan_in), 1/sqrt(fan_in)) for weight & bias.
        fan_in = in_chans * patch_size[0] * patch_size[1]
        bound = 1.0 / math.sqrt(fan_in)
        kw, kb = jax.random.split(key)
        self.weight = jax.random.uniform(
            kw, (embed_dim, in_chans, patch_size[0], patch_size[1]),
            dtype=dtype, minval=-bound, maxval=bound)
        self.bias = jax.random.uniform(
            kb, (embed_dim,), dtype=dtype, minval=-bound, maxval=bound)

    def __call__(self, x, compute_dtype=None):
        cd = self.compute_dtype if compute_dtype is None else compute_dtype
        return patch_embed(x, self.weight, self.bias, compute_dtype=cd)


if __name__ == "__main__":
    key = jax.random.PRNGKey(0)
    kx, kp = jax.random.split(key)

    # Small but representative shapes: batch=2, 3 channels, 16x16 image, 8x8 patches,
    # embed_dim=32 -> 4 patches of length 192 each, projected to 32 dims.
    B, C, H, W = 2, 3, 16, 16
    patch, embed_dim = 8, 32

    x = jax.random.normal(kx, (B, C, H, W), dtype=jnp.float32)
    module = PatchEmbed(img_size=(H, W), patch_size=patch, in_chans=C,
                        embed_dim=embed_dim, key=kp)

    # Reference: XLA strided conv (== torch Conv2d(kernel=patch, stride=patch))
    # followed by flatten(2) + transpose(1,2) + bias.
    conv = jax.lax.conv_general_dilated(
        x, module.weight, window_strides=module.patch_size, padding="VALID",
        dimension_numbers=("NCHW", "OIHW", "NCHW"))
    ref = conv.reshape(B, embed_dim, -1).transpose(0, 2, 1) + module.bias[None, None, :]

    # f32 operands: exact parity with the reference.
    out_f32 = jax.block_until_ready(module(x, compute_dtype=jnp.float32))
    assert out_f32.shape == (B, module.num_patches, embed_dim), out_f32.shape
    assert out_f32.dtype == x.dtype
    assert jnp.allclose(out_f32, ref, atol=1e-4, rtol=1e-4), \
        float(jnp.abs(out_f32 - ref).max())

    # bf16 operands (default, fast path): f32 accumulation keeps the error tiny.
    out_bf16 = jax.block_until_ready(module(x))
    assert out_bf16.shape == (B, module.num_patches, embed_dim), out_bf16.shape
    assert out_bf16.dtype == x.dtype
    assert jnp.allclose(out_bf16, ref, atol=2e-2, rtol=2e-2), \
        float(jnp.abs(out_bf16 - ref).max())

    print("KERNEL_OK")
</pallas_src>

<mosaic_0001>
module attributes {stable_mosaic.version = 11 : i64} {
  func.func @_patch_embed_matmul_kernel(%arg0: i32, %arg1: i32, %arg2: memref<16x192xf32, #tpu.memory_space<vmem>>, %arg3: memref<192x128xf32, #tpu.memory_space<vmem>>, %arg4: memref<1x128xf32, #tpu.memory_space<vmem>>, %arg5: memref<16x128xf32, #tpu.memory_space<vmem>>) attributes {dimension_semantics = [#tpu.dimension_semantics<parallel>, #tpu.dimension_semantics<parallel>], iteration_bounds = array<i64: 1, 1>, scalar_prefetch = 0 : i64, scratch_operands = 0 : i64, tpu.core_type = #tpu.core_type<tc>, window_params = [{transform_indices = @transform_0, window_bounds = array<i64: 16, 192>}, {transform_indices = @transform_1, window_bounds = array<i64: 192, 128>}, {transform_indices = @transform_2, window_bounds = array<i64: 1, 128>}, {transform_indices = @transform_3, window_bounds = array<i64: 16, 128>}]} {
    %c0 = arith.constant 0 : index
    %c0_0 = arith.constant 0 : index
    %0 = vector.load %arg2[%c0, %c0_0] : memref<16x192xf32, #tpu.memory_space<vmem>>, vector<16x192xf32>
    %c0_1 = arith.constant 0 : index
    %c0_2 = arith.constant 0 : index
    %1 = vector.load %arg3[%c0_1, %c0_2] : memref<192x128xf32, #tpu.memory_space<vmem>>, vector<192x128xf32>
    %cst = arith.constant dense<0.000000e+00> : vector<16x128xf32>
    %2 = tpu.matmul %0, %1, %cst {dimension_numbers = #tpu.dot_dimension_numbers<[1], [0], [0], [1], [0, 0, 1, 1], [], []>} : vector<16x192xf32>, vector<192x128xf32>, vector<16x128xf32> -> vector<16x128xf32>
    %c0_3 = arith.constant 0 : index
    %c0_4 = arith.constant 0 : index
    %3 = vector.load %arg4[%c0_3, %c0_4] : memref<1x128xf32, #tpu.memory_space<vmem>>, vector<1x128xf32>
    %4 = vector.broadcast %3 : vector<1x128xf32> to vector<16x128xf32>
    %5 = arith.addf %2, %4 : vector<16x128xf32>
    %c0_5 = arith.constant 0 : index
    %c0_6 = arith.constant 0 : index
    %6 = vector.load %arg5[%c0_5, %c0_6] : memref<16x128xf32, #tpu.memory_space<vmem>>, vector<16x128xf32>
    tpu.vector_store %arg5[%c0_5, %c0_6], %5 {strides = array<i32>} : memref<16x128xf32, #tpu.memory_space<vmem>>, vector<16x128xf32>,
    return
  }
  func.func @transform_0(%arg0: i32, %arg1: i32) -> (i32, i32) {
    %c0_i32 = arith.constant 0 : i32
    %c0_i32_0 = arith.constant 0 : i32
    return %arg1, %c0_i32 : i32, i32
  }
  func.func @transform_1(%arg0: i32, %arg1: i32) -> (i32, i32) {
    %c0_i32 = arith.constant 0 : i32
    %c0_i32_0 = arith.constant 0 : i32
    return %c0_i32, %arg0 : i32, i32
  }
  func.func @transform_2(%arg0: i32, %arg1: i32) -> (i32, i32) {
    %c0_i32 = arith.constant 0 : i32
    %c0_i32_0 = arith.constant 0 : i32
    return %c0_i32, %arg0 : i32, i32
  }
  func.func @transform_3(%arg0: i32, %arg1: i32) -> (i32, i32) {
    %c0_i32 = arith.constant 0 : i32
    return %arg1, %arg0 : i32, i32
  }
}

</mosaic_0001>

<llo_original>
// kernel: tpu_custom_call.1
$region0: #{tpu_custom_call.1}
  #allocation0 [shape = 'u32[]', space=smem, size = 0x4, offset = 0x4, fixed_abs, tag = 'smem constant byte address 0x4 - core index']
  #allocation1 [shape = 'u32[72,128]{1,0:T(1,128)}', space=vmem, size = 0x9000, scoped, tag = 'internal scratch']
  %s0 = inlined_call_operand.hbm [shape: f32[16,192], index: 0, kind: input, shape index: {}]
  %s1 = inlined_call_operand.hbm [shape: f32[192,128], index: 1, kind: input, shape index: {}]
  %s2 = inlined_call_operand.vmem [shape: f32[1,128], index: 2, kind: input, shape index: {}]
  %s3 = inlined_call_operand.hbm [shape: f32[16,128], index: 3, kind: output, shape index: {}]
  %s4 = sld [smem:[#allocation0]]
  $region30: #{tpu_custom_call.1} parent=0
    _
  %s6 = ssub.s32 1, %s4
  %s7 = scalar_select 0, %s6, %s4
  $region1: #{tpu_custom_call.1} parent=0
    #allocation2 [shape = 'u8[16384]{0}', space=vmem, size = 0x4000, scoped, tag = 'input window, operand 0, single buffered']
    #allocation3 [shape = 's32[1]{0}', space=sflag, size = 0x4, scoped, tag = 'scoped memory for tpu_custom_call.1']
    #allocation4 [shape = 's32[1]{0}', space=sflag, size = 0x4, scoped, tag = 'scoped memory for tpu_custom_call.1']
    #allocation5 [shape = 'u8[98304]{0}', space=vmem, size = 0x18000, scoped, tag = 'input window, operand 1, single buffered']
    #allocation6 [shape = 's32[1]{0}', space=sflag, size = 0x4, scoped, tag = 'scoped memory for tpu_custom_call.1']
    #allocation7 [shape = 'u8[8192]{0}', space=vmem, size = 0x2000, scoped, tag = 'output window, operand 0, single buffered']
    %8 = vsyncpa [#allocation3], 0
    %9 = vsyncpa [#allocation6], 0
    %10 = vsyncpa [#allocation4], 0
    // Predicated region
    $region2: #{tpu_custom_call.1} parent=1 // pred_check
      _
    $region3: #{tpu_custom_call.1} parent=1 // pred_check_branch
      %12 = sbr.rel (0) target = $region5
    $region4: #{tpu_custom_call.1} parent=1 // pred_region
      %14 = vsyncadd [#allocation3], 0
      %s15 = sshll.u32 %s0, 4
      %s16 = int_to_ptr.hbm [resolvable:$true] %s15
      %s17 = sshll.u32 [#allocation2], 4
      %s18 = int_to_ptr.vmem [resolvable:$true] %s17
      %23 = dma.hbm_to_vmem [thread:$0]  %s16, 512, %s18, [#allocation3], 256, 256, 16
    $region5: #{tpu_custom_call.1} parent=1 // pred_fallthru
      _
    // Predicated region
    $region6: #{tpu_custom_call.1} parent=1 // pred_check
      _
    $region7: #{tpu_custom_call.1} parent=1 // pred_check_branch
      %25 = sbr.rel (0) target = $region9
    $region8: #{tpu_custom_call.1} parent=1 // pred_region
      %27 = vsyncadd [#allocation6], 0
      %s28 = sshll.u32 %s1, 4
      %s29 = int_to_ptr.hbm [resolvable:$true] %s28
      %s30 = sshll.u32 [#allocation5], 4
      %s31 = int_to_ptr.vmem [resolvable:$true] %s30
      %36 = dma.hbm_to_vmem [thread:$0]  %s29, 3072, %s31, [#allocation6], 128, 128, 8
    $region9: #{tpu_custom_call.1} parent=1 // pred_fallthru
      _
    // Predicated region
    $region10: #{tpu_custom_call.1} parent=1 // pred_check
      _
    $region11: #{tpu_custom_call.1} parent=1 // pred_check_branch
      %38 = sbr.rel (0) target = $region13
    $region12: #{tpu_custom_call.1} parent=1 // pred_region
      _
    $region13: #{tpu_custom_call.1} parent=1 // pred_fallthru
      _
    // Predicated region
    $region14: #{tpu_custom_call.1} parent=1 // pred_check
      _
    $region15: #{tpu_custom_call.1} parent=1 // pred_check_branch
      %40 = sbr.rel (0) target = $region17
    $region16: #{tpu_custom_call.1} parent=1 // pred_region
      %42 = dma.done [#allocation3], 512
    $region17: #{tpu_custom_call.1} parent=1 // pred_fallthru
      _
    // Predicated region
    $region18: #{tpu_custom_call.1} parent=1 // pred_check
      _
    $region19: #{tpu_custom_call.1} parent=1 // pred_check_branch
      %44 = sbr.rel (0) target = $region21
    $region20: #{tpu_custom_call.1} parent=1 // pred_region
      %46 = dma.done [#allocation6], 3072
    $region21: #{tpu_custom_call.1} parent=1 // pred_fallthru
      _
    %v47 = vld [vmem:[#allocation2] sm:$0xff]
    %v48 = vld [vmem:[#allocation2 + $0x8] sm:$0xff]
    %v49 = vld [vmem:[#allocation2 + $0x10] sm:$0xff]
    %v50 = vld [vmem:[#allocation2 + $0x18] sm:$0xff]
    %v51 = vld [vmem:[#allocation5] sm:$0xff]
    %v52 = vld [vmem:[#allocation5 + $0x8] sm:$0xff]
    %v53 = vld [vmem:[#allocation5 + $0x10] sm:$0xff]
    %v54 = vld [vmem:[#allocation5 + $0x18] sm:$0xff]
    %v55 = vld [vmem:[#allocation5 + $0x20] sm:$0xff]
    %v56 = vld [vmem:[#allocation5 + $0x28] sm:$0xff]
    %v57 = vld [vmem:[#allocation5 + $0x30] sm:$0xff]
    %v58 = vld [vmem:[#allocation5 + $0x38] sm:$0xff]
    %v59 = vld [vmem:[#allocation5 + $0x40] sm:$0xff]
    %v60 = vld [vmem:[#allocation5 + $0x48] sm:$0xff]
    %v61 = vld [vmem:[#allocation5 + $0x50] sm:$0xff]
    %v62 = vld [vmem:[#allocation5 + $0x58] sm:$0xff]
    %v63 = vld [vmem:[#allocation5 + $0x60] sm:$0xff]
    %v64 = vld [vmem:[#allocation5 + $0x68] sm:$0xff]
    %v65 = vld [vmem:[#allocation5 + $0x70] sm:$0xff]
    %v66 = vld [vmem:[#allocation5 + $0x78] sm:$0xff]
    %v67 = vld [vmem:[#allocation5 + $0x80] sm:$0xff]
    %v68 = vld [vmem:[#allocation5 + $0x88] sm:$0xff]
    %v69 = vld [vmem:[#allocation5 + $0x90] sm:$0xff]
    %v70 = vld [vmem:[#allocation5 + $0x98] sm:$0xff]
    %v71 = vld [vmem:[#allocation5 + $0xa0] sm:$0xff]
    %v72 = vld [vmem:[#allocation5 + $0xa8] sm:$0xff]
    %v73 = vld [vmem:[#allocation5 + $0xb0] sm:$0xff]
    %v74 = vld [vmem:[#allocation5 + $0xb8] sm:$0xff]
    %v75 = vld [vmem:[%s2] sm:$0x1]
    %v77 = vperm.slane %v75, 0
    %vm79 = vcmask 523264
    %v81 = vsel %vm79, %v48, 0
    %v84 = vsel %vm79, %v50, 0
    %86 = vmatpush.msra.mxu0 %v66
    %87 = vmatpush.msra.mxu0 %v65
    %88 = vmatpush.msra.mxu0 %v64
    %89 = vmatpush.msra.mxu0 %v63
    %90 = vmatpush.msra.mxu0 %v62
    %91 = vmatpush.msra.mxu0 %v61
    %92 = vmatpush.msra.mxu0 %v60
    %93 = vmatpush.msra.mxu0 %v59
    %94 = vmatpush.msra.mxu0 %v58
    %95 = vmatpush.msra.mxu0 %v57
    %96 = vmatpush.msra.mxu0 %v56
    %97 = vmatpush.msra.mxu0 %v55
    %98 = vmatpush.msra.mxu0 %v54
    %99 = vmatpush.msra.mxu0 %v53
    %100 = vmatpush.msra.mxu0 %v52
    %101 = vmatpush.msra.mxu0 %v51
    %102 = vmatmul.f32.gmra.mxu0 %v47
    %v103 = vpop.f32.mrf.mxu0
    %v104 = vadd.f32 %v77, %v103
    %105 = vmatmul.f32.gmra.mxu0 %v49
    %v106 = vpop.f32.mrf.mxu0
    %v107 = vadd.f32 %v77, %v106
    %108 = vdwg.mxu0
    %109 = vmatpush.msra.mxu0 0.0
    %110 = vmatpush.msra.mxu0 0.0
    %111 = vmatpush.msra.mxu0 0.0
    %112 = vmatpush.msra.mxu0 0.0
    %113 = vmatpush.msra.mxu0 0.0
    %114 = vmatpush.msra.mxu0 0.0
    %115 = vmatpush.msra.mxu0 0.0
    %116 = vmatpush.msra.mxu0 0.0
    %117 = vmatpush.msra.mxu0 %v74
    %118 = vmatpush.msra.mxu0 %v73
    %119 = vmatpush.msra.mxu0 %v72
    %120 = vmatpush.msra.mxu0 %v71
    %121 = vmatpush.msra.mxu0 %v70
    %122 = vmatpush.msra.mxu0 %v69
    %123 = vmatpush.msra.mxu0 %v68
    %124 = vmatpush.msra.mxu0 %v67
    %125 = vmatmul.f32.gmra.mxu0 %v81
    %v126 = vpop.f32.mrf.mxu0
    %v127 = vadd.f32 %v104, %v126
    %128 = vmatmul.f32.gmra.mxu0 %v84
    %v129 = vpop.f32.mrf.mxu0
    %v130 = vadd.f32 %v107, %v129
    %131 = vdwg.mxu0
    %132 = vst [vmem:[#allocation7] sm:$0xff] %v127
    %133 = vst [vmem:[#allocation7 + $0x8] sm:$0xff] %v130
    // Predicated region
    $region22: #{tpu_custom_call.1} parent=1 // pred_check
      _
    $region23: #{tpu_custom_call.1} parent=1 // pred_check_branch
      %135 = sbr.rel (0) target = $region25
    $region24: #{tpu_custom_call.1} parent=1 // pred_region
      %137 = vsyncadd [#allocation4], 0
      %s138 = sshll.u32 [#allocation7], 4
      %s139 = int_to_ptr.vmem [resolvable:$true] %s138
      %s140 = sshll.u32 %s3, 4
      %s141 = int_to_ptr.hbm [resolvable:$true] %s140
      %146 = dma.vmem_to_hbm [thread:$0]  %s139, 256, %s141, [#allocation4], 128, 128, 8
    $region25: #{tpu_custom_call.1} parent=1 // pred_fallthru
      _
    // Predicated region
    $region26: #{tpu_custom_call.1} parent=1 // pred_check
      _
    $region27: #{tpu_custom_call.1} parent=1 // pred_check_branch
      %148 = sbr.rel (0) target = $region29
    $region28: #{tpu_custom_call.1} parent=1 // pred_region
      %150 = dma.done [#allocation4], 256
    $region29: #{tpu_custom_call.1} parent=1 // pred_fallthru
      _
    %151 = vsyncpa [#allocation3], 1
    %152 = vsyncpa [#allocation6], 1
    %153 = vsyncpa [#allocation4], 1

</llo_original>
